<compile_context>
chip_gen: v5e
topology: v5e:2x2
jax: 0.10.0
libtpu: 0.0.40
codegen_flags: <defaults>
</compile_context>

<pallas_src>
import math

import jax
import jax.numpy as jnp
from jax.experimental import pallas as pl
from jax.experimental.pallas import tpu as pltpu


# ----------------------------- Pallas kernel -----------------------------

def _silu(x):
    return x * jax.nn.sigmoid(x)


def fused_gcn_unet_kernel(a_ref, lab_ref, x_ref, temb_ref,
                          d0_w_ref, d1_w_ref, u0_w_ref, u1_w_ref, b_ref,
                          o_ref):
    """One batch sample per grid step.  Weights / A_hat / label emb are resident."""
    f32 = jnp.float32
    a = a_ref[...]                       # (N, N) GCN-normalized adjacency (compute dtype)
    cdt = a.dtype                        # f32 or bf16 (MXU input dtype)

    # x_t = X_noisy[b] + time_emb[b] + label_emb_m   (f32 VPU adds)
    x_t = x_ref[...] + temb_ref[...] + lab_ref[...]

    # Per-layer output widths (static python ints) drive the stacked-bias slices.
    f_d0 = d0_w_ref.shape[1]
    f_d1 = d1_w_ref.shape[1]
    f_u0 = u0_w_ref.shape[1]
    f_u1 = u1_w_ref.shape[1]
    h_dim = f_d0

    d0_b = b_ref[0:1, :f_d0]             # static slices of the (4, maxF) bias stack
    d1_b = b_ref[1:2, :f_d1]
    u0_b = b_ref[2:3, :f_u0]
    u1_b = b_ref[3:4, :f_u1]

    def gcn(x, w_ref, b, act):
        # A @ (X @ W) == (A @ X) @ W ; keep the NxN matmul at the narrower width.
        w = w_ref[...]
        xc = x.astype(cdt)
        if w.shape[1] > w.shape[0]:      # F_out > F_in: aggregate first
            ax = jnp.dot(a, xc, preferred_element_type=f32)
            h = jnp.dot(ax.astype(cdt), w, preferred_element_type=f32) + b
        else:                            # F_out <= F_in: transform first
            xw = jnp.dot(xc, w, preferred_element_type=f32)
            h = jnp.dot(a, xw.astype(cdt), preferred_element_type=f32) + b
        return _silu(h) if act else h

    # --- downGNN ---
    h0 = gcn(x_t, d0_w_ref, d0_b, act=True)      # D   -> H    (residual link)
    h1 = gcn(h0, d1_w_ref, d1_b, act=True)       # H   -> H/2

    # --- upGNN ---
    u0 = gcn(h1, u0_w_ref, u0_b, act=True)       # H/2 -> H

    # last GCN (2H -> D): cat([u0, h0]) @ W == u0 @ W[:H] + h0 @ W[H:]
    # (zero-cost static row views of the resident (2H, D) weight)
    xw = (jnp.dot(u0.astype(cdt), u1_w_ref[:h_dim, :], preferred_element_type=f32)
          + jnp.dot(h0.astype(cdt), u1_w_ref[h_dim:, :], preferred_element_type=f32))
    u1 = jnp.dot(a, xw.astype(cdt), preferred_element_type=f32) + u1_b
    o_ref[...] = _silu(u1).astype(o_ref.dtype)


# ------------------------------ JAX glue ----------------------------------

def get_timestep_embedding(timesteps, embedding_dim):
    """Standard DDPM sinusoidal timestep embedding.  timesteps: (B,) int."""
    half_dim = embedding_dim // 2
    emb = math.log(10000.0) / (half_dim - 1)
    emb = jnp.exp(jnp.arange(half_dim, dtype=jnp.float32) * -emb)
    emb = timesteps.astype(jnp.float32)[:, None] * emb[None, :]
    emb = jnp.concatenate([jnp.sin(emb), jnp.cos(emb)], axis=1)
    if embedding_dim % 2 == 1:
        emb = jnp.pad(emb, ((0, 0), (0, 1)))
    return emb


def gcn_norm_adj(edge_index, num_nodes):
    """Dense D^{-1/2} (A + I) D^{-1/2} as used by torch_geometric GCNConv."""
    src, dst = edge_index[0], edge_index[1]
    a = jnp.zeros((num_nodes, num_nodes), jnp.float32)
    a = a.at[dst, src].set(1.0)                     # messages flow src -> dst
    a = a + jnp.eye(num_nodes, dtype=jnp.float32)   # add self loops
    deg = a.sum(axis=1)
    d_inv_sqrt = 1.0 / jnp.sqrt(deg)
    return d_inv_sqrt[:, None] * a * d_inv_sqrt[None, :]


def init_params(key, input_dim, gnn_dim):
    """Deterministic synthetic parameter init matching the module's shapes."""
    def lin(k, fin, fout):
        kw, _ = jax.random.split(k)
        scale = 1.0 / math.sqrt(fin)
        w = jax.random.uniform(kw, (fin, fout), jnp.float32, -scale, scale)
        b = jnp.zeros((1, fout), jnp.float32)
        return w, b

    keys = jax.random.split(key, 8)
    p = {}
    # time_mlp: Linear(D, D), Linear(D, D)
    p["t_w1"], p["t_b1"] = lin(keys[0], input_dim, input_dim)
    p["t_w2"], p["t_b2"] = lin(keys[1], input_dim, input_dim)
    # downGNN: GCN(D -> H), GCN(H -> H//2)
    p["d0_w"], p["d0_b"] = lin(keys[2], input_dim, gnn_dim)
    p["d1_w"], p["d1_b"] = lin(keys[3], gnn_dim, gnn_dim // 2)
    # upGNN: GCN(H//2 -> H), GCN(2H -> D)
    p["u0_w"], p["u0_b"] = lin(keys[4], gnn_dim // 2, gnn_dim)
    p["u1_w"], p["u1_b"] = lin(keys[5], 2 * gnn_dim, input_dim)
    # label embedding: Embedding(2, D)
    p["label_emb"] = jax.random.normal(keys[6], (2, input_dim), jnp.float32)
    return p


def pack_params(params, compute_dtype=jnp.float32):
    """Kernel-side parameter packing: cast MXU operands, stack the 4 GCN biases."""
    cdt = compute_dtype
    biases = [params["d0_b"], params["d1_b"], params["u0_b"], params["u1_b"]]
    maxf = max(x.shape[1] for x in biases)
    bias = jnp.concatenate(
        [jnp.pad(x, ((0, 0), (0, maxf - x.shape[1]))) for x in biases], axis=0)
    return {
        "d0_w": params["d0_w"].astype(cdt),
        "d1_w": params["d1_w"].astype(cdt),
        "u0_w": params["u0_w"].astype(cdt),
        "u1_w": params["u1_w"].astype(cdt),
        "bias": bias.astype(jnp.float32),        # biases stay f32 (post-accumulation add)
        "t_w1": params["t_w1"], "t_b1": params["t_b1"],
        "t_w2": params["t_w2"], "t_b2": params["t_b2"],
        "label_emb": params["label_emb"],
    }


@jax.jit
def cgen_ga_diffusion_step(packed, x_noisy, a_hat, t, train_anm, train_norm):
    """Batched CGenGA.diffusion_step: B (x_t, t) samples sharing one graph."""
    b, n, d = x_noisy.shape
    cdt = packed["d0_w"].dtype

    # --- time-MLP hoisted into the jitted wrapper (tiny ops, XLA fuses them) ---
    temb = get_timestep_embedding(t, d)                              # (B, D)
    temb = _silu(temb @ packed["t_w1"] + packed["t_b1"])
    temb = (temb @ packed["t_w2"] + packed["t_b2"])[:, None, :]      # (B, 1, D)

    # --- init_lable_emb: anm rows first, norm rows override (matches torch code) ---
    lab = jnp.zeros((n, d), jnp.float32)
    lab = jnp.where(train_anm[:, None], packed["label_emb"][1][None, :], lab)
    lab = jnp.where(train_norm[:, None], packed["label_emb"][0][None, :], lab)

    a_c = a_hat.astype(cdt)                                          # bf16 halves the A_hat DMA

    h = packed["d0_w"].shape[1]
    h2 = packed["d1_w"].shape[1]
    maxf = packed["bias"].shape[1]

    resident2 = lambda bi: (0, 0)          # same block every step -> DMA'd once
    per_batch3 = lambda bi: (bi, 0, 0)     # leading batch dim squeezed in-kernel

    return pl.pallas_call(
        fused_gcn_unet_kernel,
        out_shape=jax.ShapeDtypeStruct((b, n, d), jnp.float32),
        grid=(b,),
        in_specs=[
            pl.BlockSpec((n, n), resident2),           # A_hat            (resident)
            pl.BlockSpec((n, d), resident2),           # label_emb_m      (resident)
            pl.BlockSpec((None, n, d), per_batch3),    # x_noisy[b]
            pl.BlockSpec((None, 1, d), per_batch3),    # time_emb[b]
            pl.BlockSpec((d, h), resident2),           # downGNN[0].W     (resident)
            pl.BlockSpec((h, h2), resident2),          # downGNN[1].W     (resident)
            pl.BlockSpec((h2, h), resident2),          # upGNN[0].W       (resident)
            pl.BlockSpec((2 * h, d), resident2),       # upGNN[1].W       (resident, split in-kernel)
            pl.BlockSpec((4, maxf), resident2),        # stacked GCN biases (resident)
        ],
        out_specs=pl.BlockSpec((None, n, d), per_batch3),
        compiler_params=pltpu.CompilerParams(
            dimension_semantics=("parallel",)),        # shards over both TCs on v7x
    )(a_c, lab, x_noisy, temb,
      packed["d0_w"], packed["d1_w"], packed["u0_w"], packed["u1_w"],
      packed["bias"])


def _reference_diffusion_step(params, x_noisy, a_hat, t, train_anm, train_norm):
    """Pure-JAX f32 reference for correctness checking."""
    d = x_noisy.shape[-1]
    temb = get_timestep_embedding(t, d)
    temb = _silu(temb @ params["t_w1"] + params["t_b1"])
    temb = temb @ params["t_w2"] + params["t_b2"]                    # (B, D)

    lab = jnp.zeros(x_noisy.shape[1:], jnp.float32)
    lab = jnp.where(train_anm[:, None], params["label_emb"][1][None, :], lab)   # anm first
    lab = jnp.where(train_norm[:, None], params["label_emb"][0][None, :], lab)  # norm overrides

    x_t = x_noisy + temb[:, None, :] + lab[None, :, :]               # (B, N, D)

    def gcn(x, w, b, act):
        h = jnp.einsum("nm,bmf->bnf", a_hat, x @ w) + b
        return _silu(h) if act else h

    h0 = gcn(x_t, params["d0_w"], params["d0_b"], True)
    h1 = gcn(h0, params["d1_w"], params["d1_b"], True)
    u0 = gcn(h1, params["u0_w"], params["u0_b"], True)
    cat = jnp.concatenate([u0, h0], axis=-1)
    u1 = jnp.einsum("nm,bmf->bnf", a_hat, cat @ params["u1_w"]) + params["u1_b"]
    return _silu(u1)


# --------------------------------- main ------------------------------------

if __name__ == "__main__":
    B = 8             # batch of (x_t, t) diffusion samples sharing one graph
    N = 16            # number of graph nodes
    INPUT_DIM = 32    # args.input_dim
    GNN_DIM = 32      # args.gnn_dim

    key = jax.random.PRNGKey(0)
    k_x, k_p, k_t = jax.random.split(key, 3)

    # noisy node features X_t: [B, N, D]
    x_noisy = jax.random.normal(k_x, (B, N, INPUT_DIM), jnp.float32)

    # bidirectional ring graph edge_index: [2, 2N]
    src = jnp.arange(N, dtype=jnp.int32)
    dst = (src + 1) % N
    edge_index = jnp.stack(
        [jnp.concatenate([src, dst]), jnp.concatenate([dst, src])], axis=0)
    a_hat = gcn_norm_adj(edge_index, N)

    # one diffusion timestep per batch sample
    t = jax.random.randint(k_t, (B,), 0, 1000, dtype=jnp.int32)

    # class-conditioning masks (data.train_anm / data.train_norm)
    train_anm = jnp.zeros((N,), jnp.bool_).at[jnp.array([0, 1])].set(True)
    train_norm = jnp.zeros((N,), jnp.bool_).at[jnp.array([2, 3])].set(True)

    params = init_params(k_p, INPUT_DIM, GNN_DIM)
    ref = _reference_diffusion_step(params, x_noisy, a_hat, t, train_anm, train_norm)

    # --- f32 path (exact check) ---
    packed_f32 = pack_params(params, jnp.float32)
    out_f32 = cgen_ga_diffusion_step(packed_f32, x_noisy, a_hat, t, train_anm, train_norm)
    out_f32 = jax.block_until_ready(out_f32)
    assert out_f32.shape == (B, N, INPUT_DIM)
    assert bool(jnp.all(jnp.isfinite(out_f32)))
    assert bool(jnp.allclose(out_f32, ref, rtol=5e-3, atol=5e-3))

    # --- bf16 MXU path (native on v5e/v6e/v7x): bf16 A_hat/weights, f32 accumulate ---
    packed_bf16 = pack_params(params, jnp.bfloat16)
    out_bf16 = cgen_ga_diffusion_step(packed_bf16, x_noisy, a_hat, t, train_anm, train_norm)
    out_bf16 = jax.block_until_ready(out_bf16)
    assert bool(jnp.all(jnp.isfinite(out_bf16)))
    assert bool(jnp.allclose(out_bf16, ref, rtol=5e-2, atol=5e-2))

    print("KERNEL_OK")
</pallas_src>

<mosaic_0001>
module attributes {stable_mosaic.version = 11 : i64} {
  func.func @fused_gcn_unet_kernel(%arg0: i32, %arg1: memref<16x16xf32, #tpu.memory_space<vmem>>, %arg2: memref<16x32xf32, #tpu.memory_space<vmem>>, %arg3: memref<1x16x32xf32, #tpu.memory_space<vmem>>, %arg4: memref<1x1x32xf32, #tpu.memory_space<vmem>>, %arg5: memref<32x32xf32, #tpu.memory_space<vmem>>, %arg6: memref<32x16xf32, #tpu.memory_space<vmem>>, %arg7: memref<16x32xf32, #tpu.memory_space<vmem>>, %arg8: memref<64x32xf32, #tpu.memory_space<vmem>>, %arg9: memref<4x32xf32, #tpu.memory_space<vmem>>, %arg10: memref<1x16x32xf32, #tpu.memory_space<vmem>>) attributes {dimension_semantics = [#tpu.dimension_semantics<parallel>], iteration_bounds = array<i64: 8>, scalar_prefetch = 0 : i64, scratch_operands = 0 : i64, tpu.core_type = #tpu.core_type<tc>, window_params = [{pipeline_mode = #tpu.pipeline_mode<synchronous>, transform_indices = @transform_0, window_bounds = array<i64: 16, 16>}, {pipeline_mode = #tpu.pipeline_mode<synchronous>, transform_indices = @transform_1, window_bounds = array<i64: 16, 32>}, {transform_indices = @transform_2, window_bounds = array<i64: 1, 16, 32>}, {transform_indices = @transform_3, window_bounds = array<i64: 1, 1, 32>}, {pipeline_mode = #tpu.pipeline_mode<synchronous>, transform_indices = @transform_4, window_bounds = array<i64: 32, 32>}, {pipeline_mode = #tpu.pipeline_mode<synchronous>, transform_indices = @transform_5, window_bounds = array<i64: 32, 16>}, {pipeline_mode = #tpu.pipeline_mode<synchronous>, transform_indices = @transform_6, window_bounds = array<i64: 16, 32>}, {pipeline_mode = #tpu.pipeline_mode<synchronous>, transform_indices = @transform_7, window_bounds = array<i64: 64, 32>}, {pipeline_mode = #tpu.pipeline_mode<synchronous>, transform_indices = @transform_8, window_bounds = array<i64: 4, 32>}, {transform_indices = @transform_9, window_bounds = array<i64: 1, 16, 32>}]} {
    %c0 = arith.constant 0 : index
    %c0_0 = arith.constant 0 : index
    %0 = vector.load %arg1[%c0, %c0_0] : memref<16x16xf32, #tpu.memory_space<vmem>>, vector<16x16xf32>
    %c0_1 = arith.constant 0 : index
    %c0_2 = arith.constant 0 : index
    %c0_3 = arith.constant 0 : index
    %1 = vector.load %arg3[%c0_1, %c0_2, %c0_3] : memref<1x16x32xf32, #tpu.memory_space<vmem>>, vector<1x16x32xf32>
    %2 = vector.shape_cast %1 : vector<1x16x32xf32> to vector<16x32xf32>
    %c0_4 = arith.constant 0 : index
    %c0_5 = arith.constant 0 : index
    %c0_6 = arith.constant 0 : index
    %3 = vector.load %arg4[%c0_4, %c0_5, %c0_6] : memref<1x1x32xf32, #tpu.memory_space<vmem>>, vector<1x1x32xf32>
    %4 = vector.shape_cast %3 : vector<1x1x32xf32> to vector<1x32xf32>
    %5 = vector.broadcast %4 : vector<1x32xf32> to vector<16x32xf32>
    %6 = arith.addf %2, %5 : vector<16x32xf32>
    %c0_7 = arith.constant 0 : index
    %c0_8 = arith.constant 0 : index
    %7 = vector.load %arg2[%c0_7, %c0_8] : memref<16x32xf32, #tpu.memory_space<vmem>>, vector<16x32xf32>
    %8 = arith.addf %6, %7 : vector<16x32xf32>
    %c0_9 = arith.constant 0 : index
    %c0_10 = arith.constant 0 : index
    %9 = vector.load %arg9[%c0_9, %c0_10] : memref<4x32xf32, #tpu.memory_space<vmem>>, vector<1x32xf32>
    %c1 = arith.constant 1 : index
    %c0_11 = arith.constant 0 : index
    %10 = vector.load %arg9[%c1, %c0_11] : memref<4x32xf32, #tpu.memory_space<vmem>>, vector<1x16xf32>
    %c2 = arith.constant 2 : index
    %c0_12 = arith.constant 0 : index
    %11 = vector.load %arg9[%c2, %c0_12] : memref<4x32xf32, #tpu.memory_space<vmem>>, vector<1x32xf32>
    %c3 = arith.constant 3 : index
    %c0_13 = arith.constant 0 : index
    %12 = vector.load %arg9[%c3, %c0_13] : memref<4x32xf32, #tpu.memory_space<vmem>>, vector<1x32xf32>
    %c0_14 = arith.constant 0 : index
    %c0_15 = arith.constant 0 : index
    %13 = vector.load %arg5[%c0_14, %c0_15] : memref<32x32xf32, #tpu.memory_space<vmem>>, vector<32x32xf32>
    %cst = arith.constant dense<0.000000e+00> : vector<16x32xf32>
    %14 = tpu.matmul %8, %13, %cst {dimension_numbers = #tpu.dot_dimension_numbers<[1], [0], [0], [1], [0, 0, 1, 1], [], []>} : vector<16x32xf32>, vector<32x32xf32>, vector<16x32xf32> -> vector<16x32xf32>
    %cst_16 = arith.constant dense<0.000000e+00> : vector<16x32xf32>
    %15 = tpu.matmul %0, %14, %cst_16 {dimension_numbers = #tpu.dot_dimension_numbers<[1], [0], [0], [1], [0, 0, 1, 1], [], []>} : vector<16x16xf32>, vector<16x32xf32>, vector<16x32xf32> -> vector<16x32xf32>
    %16 = vector.broadcast %9 : vector<1x32xf32> to vector<16x32xf32>
    %17 = arith.addf %15, %16 : vector<16x32xf32>
    %18 = arith.negf %17 : vector<16x32xf32>
    %19 = math.exp %18 : vector<16x32xf32>
    %cst_17 = arith.constant 1.000000e+00 : f32
    %20 = vector.broadcast %cst_17 : f32 to vector<16x32xf32>
    %21 = arith.addf %20, %19 : vector<16x32xf32>
    %22 = arith.divf %20, %21 : vector<16x32xf32>
    %23 = arith.mulf %17, %22 : vector<16x32xf32>
    %c0_18 = arith.constant 0 : index
    %c0_19 = arith.constant 0 : index
    %24 = vector.load %arg6[%c0_18, %c0_19] : memref<32x16xf32, #tpu.memory_space<vmem>>, vector<32x16xf32>
    %cst_20 = arith.constant dense<0.000000e+00> : vector<16x16xf32>
    %25 = tpu.matmul %23, %24, %cst_20 {dimension_numbers = #tpu.dot_dimension_numbers<[1], [0], [0], [1], [0, 0, 1, 1], [], []>} : vector<16x32xf32>, vector<32x16xf32>, vector<16x16xf32> -> vector<16x16xf32>
    %cst_21 = arith.constant dense<0.000000e+00> : vector<16x16xf32>
    %26 = tpu.matmul %0, %25, %cst_21 {dimension_numbers = #tpu.dot_dimension_numbers<[1], [0], [0], [1], [0, 0, 1, 1], [], []>} : vector<16x16xf32>, vector<16x16xf32>, vector<16x16xf32> -> vector<16x16xf32>
    %27 = vector.broadcast %10 : vector<1x16xf32> to vector<16x16xf32>
    %28 = arith.addf %26, %27 : vector<16x16xf32>
    %29 = arith.negf %28 : vector<16x16xf32>
    %30 = math.exp %29 : vector<16x16xf32>
    %cst_22 = arith.constant 1.000000e+00 : f32
    %31 = vector.broadcast %cst_22 : f32 to vector<16x16xf32>
    %32 = arith.addf %31, %30 : vector<16x16xf32>
    %33 = arith.divf %31, %32 : vector<16x16xf32>
    %34 = arith.mulf %28, %33 : vector<16x16xf32>
    %c0_23 = arith.constant 0 : index
    %c0_24 = arith.constant 0 : index
    %35 = vector.load %arg7[%c0_23, %c0_24] : memref<16x32xf32, #tpu.memory_space<vmem>>, vector<16x32xf32>
    %cst_25 = arith.constant dense<0.000000e+00> : vector<16x16xf32>
    %36 = tpu.matmul %0, %34, %cst_25 {dimension_numbers = #tpu.dot_dimension_numbers<[1], [0], [0], [1], [0, 0, 1, 1], [], []>} : vector<16x16xf32>, vector<16x16xf32>, vector<16x16xf32> -> vector<16x16xf32>
    %cst_26 = arith.constant dense<0.000000e+00> : vector<16x32xf32>
    %37 = tpu.matmul %36, %35, %cst_26 {dimension_numbers = #tpu.dot_dimension_numbers<[1], [0], [0], [1], [0, 0, 1, 1], [], []>} : vector<16x16xf32>, vector<16x32xf32>, vector<16x32xf32> -> vector<16x32xf32>
    %38 = vector.broadcast %11 : vector<1x32xf32> to vector<16x32xf32>
    %39 = arith.addf %37, %38 : vector<16x32xf32>
    %40 = arith.negf %39 : vector<16x32xf32>
    %41 = math.exp %40 : vector<16x32xf32>
    %cst_27 = arith.constant 1.000000e+00 : f32
    %42 = vector.broadcast %cst_27 : f32 to vector<16x32xf32>
    %43 = arith.addf %42, %41 : vector<16x32xf32>
    %44 = arith.divf %42, %43 : vector<16x32xf32>
    %45 = arith.mulf %39, %44 : vector<16x32xf32>
    %c0_28 = arith.constant 0 : index
    %c0_29 = arith.constant 0 : index
    %46 = vector.load %arg8[%c0_28, %c0_29] : memref<64x32xf32, #tpu.memory_space<vmem>>, vector<32x32xf32>
    %cst_30 = arith.constant dense<0.000000e+00> : vector<16x32xf32>
    %47 = tpu.matmul %45, %46, %cst_30 {dimension_numbers = #tpu.dot_dimension_numbers<[1], [0], [0], [1], [0, 0, 1, 1], [], []>} : vector<16x32xf32>, vector<32x32xf32>, vector<16x32xf32> -> vector<16x32xf32>
    %c32 = arith.constant 32 : index
    %c0_31 = arith.constant 0 : index
    %48 = vector.load %arg8[%c32, %c0_31] : memref<64x32xf32, #tpu.memory_space<vmem>>, vector<32x32xf32>
    %cst_32 = arith.constant dense<0.000000e+00> : vector<16x32xf32>
    %49 = tpu.matmul %23, %48, %cst_32 {dimension_numbers = #tpu.dot_dimension_numbers<[1], [0], [0], [1], [0, 0, 1, 1], [], []>} : vector<16x32xf32>, vector<32x32xf32>, vector<16x32xf32> -> vector<16x32xf32>
    %50 = arith.addf %47, %49 : vector<16x32xf32>
    %cst_33 = arith.constant dense<0.000000e+00> : vector<16x32xf32>
    %51 = tpu.matmul %0, %50, %cst_33 {dimension_numbers = #tpu.dot_dimension_numbers<[1], [0], [0], [1], [0, 0, 1, 1], [], []>} : vector<16x16xf32>, vector<16x32xf32>, vector<16x32xf32> -> vector<16x32xf32>
    %52 = vector.broadcast %12 : vector<1x32xf32> to vector<16x32xf32>
    %53 = arith.addf %51, %52 : vector<16x32xf32>
    %54 = arith.negf %53 : vector<16x32xf32>
    %55 = math.exp %54 : vector<16x32xf32>
    %cst_34 = arith.constant 1.000000e+00 : f32
    %56 = vector.broadcast %cst_34 : f32 to vector<16x32xf32>
    %57 = arith.addf %56, %55 : vector<16x32xf32>
    %58 = arith.divf %56, %57 : vector<16x32xf32>
    %59 = arith.mulf %53, %58 : vector<16x32xf32>
    %c0_35 = arith.constant 0 : index
    %c0_36 = arith.constant 0 : index
    %c0_37 = arith.constant 0 : index
    %60 = vector.load %arg10[%c0_35, %c0_36, %c0_37] : memref<1x16x32xf32, #tpu.memory_space<vmem>>, vector<1x16x32xf32>
    %61 = vector.shape_cast %60 : vector<1x16x32xf32> to vector<16x32xf32>
    %62 = vector.shape_cast %59 : vector<16x32xf32> to vector<1x16x32xf32>
    tpu.vector_store %arg10[%c0_35, %c0_36, %c0_37], %62 {strides = array<i32>} : memref<1x16x32xf32, #tpu.memory_space<vmem>>, vector<1x16x32xf32>,
    return
  }
  func.func @transform_0(%arg0: i32) -> (i32, i32) {
    %c0_i32 = arith.constant 0 : i32
    %c0_i32_0 = arith.constant 0 : i32
    %c0_i32_1 = arith.constant 0 : i32
    return %c0_i32, %c0_i32_0 : i32, i32
  }
  func.func @transform_1(%arg0: i32) -> (i32, i32) {
    %c0_i32 = arith.constant 0 : i32
    %c0_i32_0 = arith.constant 0 : i32
    %c0_i32_1 = arith.constant 0 : i32
    return %c0_i32, %c0_i32_0 : i32, i32
  }
  func.func @transform_2(%arg0: i32) -> (i32, i32, i32) {
    %c0_i32 = arith.constant 0 : i32
    %c0_i32_0 = arith.constant 0 : i32
    %c0_i32_1 = arith.constant 0 : i32
    return %arg0, %c0_i32, %c0_i32_0 : i32, i32, i32
  }
  func.func @transform_3(%arg0: i32) -> (i32, i32, i32) {
    %c0_i32 = arith.constant 0 : i32
    %c0_i32_0 = arith.constant 0 : i32
    %c0_i32_1 = arith.constant 0 : i32
    return %arg0, %c0_i32, %c0_i32_0 : i32, i32, i32
  }
  func.func @transform_4(%arg0: i32) -> (i32, i32) {
    %c0_i32 = arith.constant 0 : i32
    %c0_i32_0 = arith.constant 0 : i32
    %c0_i32_1 = arith.constant 0 : i32
    return %c0_i32, %c0_i32_0 : i32, i32
  }
  func.func @transform_5(%arg0: i32) -> (i32, i32) {
    %c0_i32 = arith.constant 0 : i32
    %c0_i32_0 = arith.constant 0 : i32
    %c0_i32_1 = arith.constant 0 : i32
    return %c0_i32, %c0_i32_0 : i32, i32
  }
  func.func @transform_6(%arg0: i32) -> (i32, i32) {
    %c0_i32 = arith.constant 0 : i32
    %c0_i32_0 = arith.constant 0 : i32
    %c0_i32_1 = arith.constant 0 : i32
    return %c0_i32, %c0_i32_0 : i32, i32
  }
  func.func @transform_7(%arg0: i32) -> (i32, i32) {
    %c0_i32 = arith.constant 0 : i32
    %c0_i32_0 = arith.constant 0 : i32
    %c0_i32_1 = arith.constant 0 : i32
    return %c0_i32, %c0_i32_0 : i32, i32
  }
  func.func @transform_8(%arg0: i32) -> (i32, i32) {
    %c0_i32 = arith.constant 0 : i32
    %c0_i32_0 = arith.constant 0 : i32
    %c0_i32_1 = arith.constant 0 : i32
    return %c0_i32, %c0_i32_0 : i32, i32
  }
  func.func @transform_9(%arg0: i32) -> (i32, i32, i32) {
    %c0_i32 = arith.constant 0 : i32
    %c0_i32_0 = arith.constant 0 : i32
    %c0_i32_1 = arith.constant 0 : i32
    return %arg0, %c0_i32, %c0_i32_0 : i32, i32, i32
  }
}

</mosaic_0001>

<llo_original>
// kernel: cgen_ga_diffusion_step.1
$region0: #{cgen_ga_diffusion_step.1}
  #allocation0 [shape = 'u32[]', space=smem, size = 0x4, offset = 0x4, fixed_abs, tag = 'smem constant byte address 0x4 - core index']
  #allocation1 [shape = 'u32[72,128]{1,0:T(1,128)}', space=vmem, size = 0x9000, scoped, tag = 'internal scratch']
  %s0 = inlined_call_operand.vmem [shape: f32[16,16], index: 0, kind: input, shape index: {}]
  %s1 = inlined_call_operand.vmem [shape: f32[16,32], index: 1, kind: input, shape index: {}]
  %s2 = inlined_call_operand.hbm [shape: f32[8,16,32], index: 2, kind: input, shape index: {}]
  %s3 = inlined_call_operand.vmem [shape: f32[8,1,32], index: 3, kind: input, shape index: {}]
  %s4 = inlined_call_operand.vmem [shape: f32[32,32], index: 4, kind: input, shape index: {}]
  %s5 = inlined_call_operand.vmem [shape: f32[32,16], index: 5, kind: input, shape index: {}]
  %s6 = inlined_call_operand.vmem [shape: f32[16,32], index: 6, kind: input, shape index: {}]
  %s7 = inlined_call_operand.vmem [shape: f32[64,32], index: 7, kind: input, shape index: {}]
  %s8 = inlined_call_operand.vmem [shape: f32[4,32], index: 8, kind: input, shape index: {}]
  %s9 = inlined_call_operand.hbm [shape: f32[8,16,32], index: 9, kind: output, shape index: {}]
  %s10 = sld [smem:[#allocation0]]
  $region73: #{cgen_ga_diffusion_step.1} parent=0
    _
  %s12 = ssub.s32 1, %s10
  %s13 = scalar_select 0, %s12, %s10
  $region1: #{cgen_ga_diffusion_step.1} parent=0
    #allocation2 [shape = 'u8[16384]{0}', space=vmem, size = 0x4000, scoped, tag = 'input window, operand 2']
    #allocation3 [shape = 's32[2]{0}', space=sflag, size = 0x8, scoped, tag = 'scoped memory for cgen_ga_diffusion_step.1']
    #allocation4 [shape = 's32[2]{0}', space=sflag, size = 0x8, scoped, tag = 'scoped memory for cgen_ga_diffusion_step.1']
    #allocation5 [shape = 'u8[16384]{0}', space=vmem, size = 0x4000, scoped, tag = 'output window, operand 0']
    %14 = vsyncpa [#allocation3], 0
    %s15 = scalar_lea.sflag [#allocation3], 1
    %16 = vsyncpa %s15, 0
    %17 = vsyncpa [#allocation4], 0
    %s18 = scalar_lea.sflag [#allocation4], 1
    %19 = vsyncpa %s18, 0
    loop: start=0, step=1, limit=10
    $region2: #{cgen_ga_diffusion_step.1} parent=1 // loop_pre_header
      _
    $region3: #{cgen_ga_diffusion_step.1} parent=1 // loop_header
      %s21 = sphi 0, %s25
      %p22 = scmp.ge.s32.totalorder %s21, 10
      %s29 = sphi 0, %s29
      %s31 = sphi 0, %s29
      %s32 = sphi 0, %s31
      %s46 = sphi 0, %s32
      %s50 = sphi 0, %s50
      %s52 = sphi 0, %s50
      %s53 = sphi 0, %s52
      %s67 = sphi 0, %s53
      %s73 = sphi 0, %s75
      %s76 = sphi 0, %s73
      %s77 = sphi 0, %s76
      %s93 = sphi 0, %s77
      %s99 = sphi 0, %s101
      %s102 = sphi 0, %s99
      %s103 = sphi 0, %s102
      %s119 = sphi 0, %s103
      %s123 = sphi 0, %s123
      %s125 = sphi 0, %s123
      %s126 = sphi 0, %s125
      %s140 = sphi 0, %s126
      %s144 = sphi 0, %s144
      %s146 = sphi 0, %s144
      %s147 = sphi 0, %s146
      %s161 = sphi 0, %s147
      %s165 = sphi 0, %s165
      %s167 = sphi 0, %s165
      %s168 = sphi 0, %s167
      %s182 = sphi 0, %s168
      %s186 = sphi 0, %s186
      %s188 = sphi 0, %s186
      %s189 = sphi 0, %s188
      %s203 = sphi 0, %s189
      %s207 = sphi 0, %s207
      %s209 = sphi 0, %s207
      %s210 = sphi 0, %s209
      %s224 = sphi 0, %s210
      %s230 = sphi 0, %s232
      %s233 = sphi 0, %s230
      %s234 = sphi 0, %s233
      %s250 = sphi 0, %s234
    $region4: #{cgen_ga_diffusion_step.1} parent=1 // loop_header_branch
      %24 = sbr.rel (%p22) target = $region8
    $region5: #{cgen_ga_diffusion_step.1} parent=1 // loop_body
      %s26 = ssub.s32 %s21, 1
      %s27 = ssub.s32 %s21, 2
      %s28 = sadd.s32 %s21, 1
      %s30 = sadd.s32 %s29, 1
      %p33 = scmp.eq.s32.totalorder %s21, 7
      %p34 = scmp.ne.s32.totalorder %s29, %s31
      %p35 = scmp.eq.s32.totalorder %s21, 0
      %p36 = por %p34, %p35
      %p37 = scmp.ne.s32.totalorder %s29, %s31
      %p38 = scmp.eq.s32.totalorder %s26, 7
      %p39 = por %p37, %p38
      %p40 = scmp.ne.s32.totalorder %s31, %s32
      %p41 = scmp.eq.s32.totalorder %s26, 0
      %p42 = por %p40, %p41
      %p43 = scmp.ne.s32.totalorder %s31, %s32
      %p44 = scmp.eq.s32.totalorder %s27, 7
      %p45 = por %p43, %p44
      %p47 = scmp.ne.s32.totalorder %s32, %s46
      %p48 = scmp.eq.s32.totalorder %s27, 0
      %p49 = por %p47, %p48
      %s51 = sadd.s32 %s50, 1
      %p54 = scmp.eq.s32.totalorder %s21, 7
      %p55 = scmp.ne.s32.totalorder %s50, %s52
      %p56 = scmp.eq.s32.totalorder %s21, 0
      %p57 = por %p55, %p56
      %p58 = scmp.ne.s32.totalorder %s50, %s52
      %p59 = scmp.eq.s32.totalorder %s26, 7
      %p60 = por %p58, %p59
      %p61 = scmp.ne.s32.totalorder %s52, %s53
      %p62 = scmp.eq.s32.totalorder %s26, 0
      %p63 = por %p61, %p62
      %p64 = scmp.ne.s32.totalorder %s52, %s53
      %p65 = scmp.eq.s32.totalorder %s27, 7
      %p66 = por %p64, %p65
      %p68 = scmp.ne.s32.totalorder %s53, %s67
      %p69 = scmp.eq.s32.totalorder %s27, 0
      %p70 = por %p68, %p69
      %s71 = ssub.s32 %s21, %s28
      %p72 = scmp.eq.s32.totalorder %s71, 0
      %s74 = sadd.s32 %s73, 1
      %s75 = scalar_select %p72, %s73, %s74
      %p78 = pneg %p72
      %p79 = scmp.eq.s32.totalorder %s21, 7
      %p80 = por %p78, %p79
      %p81 = scmp.ne.s32.totalorder %s73, %s76
      %p82 = scmp.eq.s32.totalorder %s21, 0
      %p83 = por %p81, %p82
      %p84 = scmp.ne.s32.totalorder %s73, %s76
      %p85 = scmp.eq.s32.totalorder %s26, 7
      %p86 = por %p84, %p85
      %p87 = scmp.ne.s32.totalorder %s76, %s77
      %p88 = scmp.eq.s32.totalorder %s26, 0
      %p89 = por %p87, %p88
      %p90 = scmp.ne.s32.totalorder %s76, %s77
      %p91 = scmp.eq.s32.totalorder %s27, 7
      %p92 = por %p90, %p91
      %p94 = scmp.ne.s32.totalorder %s77, %s93
      %p95 = scmp.eq.s32.totalorder %s27, 0
      %p96 = por %p94, %p95
      %s97 = ssub.s32 %s21, %s28
      %p98 = scmp.eq.s32.totalorder %s97, 0
      %s100 = sadd.s32 %s99, 1
      %s101 = scalar_select %p98, %s99, %s100
      %p104 = pneg %p98
      %p105 = scmp.eq.s32.totalorder %s21, 7
      %p106 = por %p104, %p105
      %p107 = scmp.ne.s32.totalorder %s99, %s102
      %p108 = scmp.eq.s32.totalorder %s21, 0
      %p109 = por %p107, %p108
      %p110 = scmp.ne.s32.totalorder %s99, %s102
      %p111 = scmp.eq.s32.totalorder %s26, 7
      %p112 = por %p110, %p111
      %p113 = scmp.ne.s32.totalorder %s102, %s103
      %p114 = scmp.eq.s32.totalorder %s26, 0
      %p115 = por %p113, %p114
      %p116 = scmp.ne.s32.totalorder %s102, %s103
      %p117 = scmp.eq.s32.totalorder %s27, 7
      %p118 = por %p116, %p117
      %p120 = scmp.ne.s32.totalorder %s103, %s119
      %p121 = scmp.eq.s32.totalorder %s27, 0
      %p122 = por %p120, %p121
      %s124 = sadd.s32 %s123, 1
      %p127 = scmp.eq.s32.totalorder %s21, 7
      %p128 = scmp.ne.s32.totalorder %s123, %s125
      %p129 = scmp.eq.s32.totalorder %s21, 0
      %p130 = por %p128, %p129
      %p131 = scmp.ne.s32.totalorder %s123, %s125
      %p132 = scmp.eq.s32.totalorder %s26, 7
      %p133 = por %p131, %p132
      %p134 = scmp.ne.s32.totalorder %s125, %s126
      %p135 = scmp.eq.s32.totalorder %s26, 0
      %p136 = por %p134, %p135
      %p137 = scmp.ne.s32.totalorder %s125, %s126
      %p138 = scmp.eq.s32.totalorder %s27, 7
      %p139 = por %p137, %p138
      %p141 = scmp.ne.s32.totalorder %s126, %s140
      %p142 = scmp.eq.s32.totalorder %s27, 0
      %p143 = por %p141, %p142
      %s145 = sadd.s32 %s144, 1
      %p148 = scmp.eq.s32.totalorder %s21, 7
      %p149 = scmp.ne.s32.totalorder %s144, %s146
      %p150 = scmp.eq.s32.totalorder %s21, 0
      %p151 = por %p149, %p150
      %p152 = scmp.ne.s32.totalorder %s144, %s146
      %p153 = scmp.eq.s32.totalorder %s26, 7
      %p154 = por %p152, %p153
      %p155 = scmp.ne.s32.totalorder %s146, %s147
      %p156 = scmp.eq.s32.totalorder %s26, 0
      %p157 = por %p155, %p156
      %p158 = scmp.ne.s32.totalorder %s146, %s147
      %p159 = scmp.eq.s32.totalorder %s27, 7
      %p160 = por %p158, %p159
      %p162 = scmp.ne.s32.totalorder %s147, %s161
      %p163 = scmp.eq.s32.totalorder %s27, 0
      %p164 = por %p162, %p163
      %s166 = sadd.s32 %s165, 1
      %p169 = scmp.eq.s32.totalorder %s21, 7
      %p170 = scmp.ne.s32.totalorder %s165, %s167
      %p171 = scmp.eq.s32.totalorder %s21, 0
      %p172 = por %p170, %p171
      %p173 = scmp.ne.s32.totalorder %s165, %s167
      %p174 = scmp.eq.s32.totalorder %s26, 7
      %p175 = por %p173, %p174
      %p176 = scmp.ne.s32.totalorder %s167, %s168
      %p177 = scmp.eq.s32.totalorder %s26, 0
      %p178 = por %p176, %p177
      %p179 = scmp.ne.s32.totalorder %s167, %s168
      %p180 = scmp.eq.s32.totalorder %s27, 7
      %p181 = por %p179, %p180
      %p183 = scmp.ne.s32.totalorder %s168, %s182
      %p184 = scmp.eq.s32.totalorder %s27, 0
      %p185 = por %p183, %p184
      %s187 = sadd.s32 %s186, 1
      %p190 = scmp.eq.s32.totalorder %s21, 7
      %p191 = scmp.ne.s32.totalorder %s186, %s188
      %p192 = scmp.eq.s32.totalorder %s21, 0
      %p193 = por %p191, %p192
      %p194 = scmp.ne.s32.totalorder %s186, %s188
      %p195 = scmp.eq.s32.totalorder %s26, 7
      %p196 = por %p194, %p195
      %p197 = scmp.ne.s32.totalorder %s188, %s189
      %p198 = scmp.eq.s32.totalorder %s26, 0
      %p199 = por %p197, %p198
      %p200 = scmp.ne.s32.totalorder %s188, %s189
      %p201 = scmp.eq.s32.totalorder %s27, 7
      %p202 = por %p200, %p201
      %p204 = scmp.ne.s32.totalorder %s189, %s203
      %p205 = scmp.eq.s32.totalorder %s27, 0
      %p206 = por %p204, %p205
      %s208 = sadd.s32 %s207, 1
      %p211 = scmp.eq.s32.totalorder %s21, 7
      %p212 = scmp.ne.s32.totalorder %s207, %s209
      %p213 = scmp.eq.s32.totalorder %s21, 0
      %p214 = por %p212, %p213
      %p215 = scmp.ne.s32.totalorder %s207, %s209
      %p216 = scmp.eq.s32.totalorder %s26, 7
      %p217 = por %p215, %p216
      %p218 = scmp.ne.s32.totalorder %s209, %s210
      %p219 = scmp.eq.s32.totalorder %s26, 0
      %p220 = por %p218, %p219
      %p221 = scmp.ne.s32.totalorder %s209, %s210
      %p222 = scmp.eq.s32.totalorder %s27, 7
      %p223 = por %p221, %p222
      %p225 = scmp.ne.s32.totalorder %s210, %s224
      %p226 = scmp.eq.s32.totalorder %s27, 0
      %p227 = por %p225, %p226
      %s228 = ssub.s32 %s21, %s28
      %p229 = scmp.eq.s32.totalorder %s228, 0
      %s231 = sadd.s32 %s230, 1
      %s232 = scalar_select %p229, %s230, %s231
      %p235 = pneg %p229
      %p236 = scmp.eq.s32.totalorder %s21, 7
      %p237 = por %p235, %p236
      %p238 = scmp.ne.s32.totalorder %s230, %s233
      %p239 = scmp.eq.s32.totalorder %s21, 0
      %p240 = por %p238, %p239
      %p241 = scmp.ne.s32.totalorder %s230, %s233
      %p242 = scmp.eq.s32.totalorder %s26, 7
      %p243 = por %p241, %p242
      %p244 = scmp.ne.s32.totalorder %s233, %s234
      %p245 = scmp.eq.s32.totalorder %s26, 0
      %p246 = por %p244, %p245
      %p247 = scmp.ne.s32.totalorder %s233, %s234
      %p248 = scmp.eq.s32.totalorder %s27, 7
      %p249 = por %p247, %p248
      %p251 = scmp.ne.s32.totalorder %s234, %s250
      %p252 = scmp.eq.s32.totalorder %s27, 0
      %p253 = por %p251, %p252
      %p254 = scmp.le.s32.totalorder 1, %s21
      %p255 = scmp.lt.s32.totalorder %s21, 9
      %p256 = pnand %p254, %p255
      %p257 = pneg %p256
      // Predicated region
      $region9: #{cgen_ga_diffusion_step.1} parent=5 // pred_check
        _
      $region10: #{cgen_ga_diffusion_step.1} parent=5 // pred_check_branch
        %259 = sbr.rel (%p256) target = $region12
      $region11: #{cgen_ga_diffusion_step.1} parent=5 // pred_region
        %s260 = ssub.s32 %s21, 1
        // Predicated region
        $region13: #{cgen_ga_diffusion_step.1} parent=11 // pred_check
          %p261 = pneg %p42
        $region14: #{cgen_ga_diffusion_step.1} parent=11 // pred_check_branch
          %263 = sbr.rel (%p261) target = $region16
        $region15: #{cgen_ga_diffusion_step.1} parent=11 // pred_region
          _
        $region16: #{cgen_ga_diffusion_step.1} parent=11 // pred_fallthru
          _
        // Predicated region
        $region17: #{cgen_ga_diffusion_step.1} parent=11 // pred_check
          %p264 = pneg %p63
        $region18: #{cgen_ga_diffusion_step.1} parent=11 // pred_check_branch
          %266 = sbr.rel (%p264) target = $region20
        $region19: #{cgen_ga_diffusion_step.1} parent=11 // pred_region
          _
        $region20: #{cgen_ga_diffusion_step.1} parent=11 // pred_fallthru
          _
        // Predicated region
        $region21: #{cgen_ga_diffusion_step.1} parent=11 // pred_check
          %p267 = pneg %p136
        $region22: #{cgen_ga_diffusion_step.1} parent=11 // pred_check_branch
          %269 = sbr.rel (%p267) target = $region24
        $region23: #{cgen_ga_diffusion_step.1} parent=11 // pred_region
          _
        $region24: #{cgen_ga_diffusion_step.1} parent=11 // pred_fallthru
          _
        // Predicated region
        $region25: #{cgen_ga_diffusion_step.1} parent=11 // pred_check
          %p270 = pneg %p157
        $region26: #{cgen_ga_diffusion_step.1} parent=11 // pred_check_branch
          %272 = sbr.rel (%p270) target = $region28
        $region27: #{cgen_ga_diffusion_step.1} parent=11 // pred_region
          _
        $region28: #{cgen_ga_diffusion_step.1} parent=11 // pred_fallthru
          _
        // Predicated region
        $region29: #{cgen_ga_diffusion_step.1} parent=11 // pred_check
          %p273 = pneg %p178
        $region30: #{cgen_ga_diffusion_step.1} parent=11 // pred_check_branch
          %275 = sbr.rel (%p273) target = $region32
        $region31: #{cgen_ga_diffusion_step.1} parent=11 // pred_region
          _
        $region32: #{cgen_ga_diffusion_step.1} parent=11 // pred_fallthru
          _
        // Predicated region
        $region33: #{cgen_ga_diffusion_step.1} parent=11 // pred_check
          %p276 = pneg %p199
        $region34: #{cgen_ga_diffusion_step.1} parent=11 // pred_check_branch
          %278 = sbr.rel (%p276) target = $region36
        $region35: #{cgen_ga_diffusion_step.1} parent=11 // pred_region
          _
        $region36: #{cgen_ga_diffusion_step.1} parent=11 // pred_fallthru
          _
        // Predicated region
        $region37: #{cgen_ga_diffusion_step.1} parent=11 // pred_check
          %p279 = pneg %p220
        $region38: #{cgen_ga_diffusion_step.1} parent=11 // pred_check_branch
          %281 = sbr.rel (%p279) target = $region40
        $region39: #{cgen_ga_diffusion_step.1} parent=11 // pred_region
          _
        $region40: #{cgen_ga_diffusion_step.1} parent=11 // pred_fallthru
          _
      $region12: #{cgen_ga_diffusion_step.1} parent=5 // pred_fallthru
        _
      %p282 = scmp.lt.s32.totalorder %s21, 8
      // Predicated region
      $region41: #{cgen_ga_diffusion_step.1} parent=5 // pred_check
        %p283 = pneg %p282
      $region42: #{cgen_ga_diffusion_step.1} parent=5 // pred_check_branch
        %285 = sbr.rel (%p283) target = $region44
      $region43: #{cgen_ga_diffusion_step.1} parent=5 // pred_region
        // Predicated region
        $region45: #{cgen_ga_diffusion_step.1} parent=43 // pred_check
          %p286 = pneg %p83
        $region46: #{cgen_ga_diffusion_step.1} parent=43 // pred_check_branch
          %288 = sbr.rel (%p286) target = $region48
        $region47: #{cgen_ga_diffusion_step.1} parent=43 // pred_region
          %s289 = sand.u32 %s73, 1
          %s290 = scalar_lea.sflag [#allocation3], %s289
          %s291 = sand.u32 %s73, 1
          %s292 = smul.addr %s291, 16
          %s293 = scalar_lea.vmem [#allocation2], %s292
          %295 = vsyncadd %s290, 0
          %s296 = smul.addr %s21, 2
          %s297 = smul.addr %s296, 8
          %s298 = scalar_lea.hbm %s2, %s297
          %s299 = sshll.u32 %s298, 4
          %s300 = int_to_ptr.hbm [resolvable:$true] %s299
          %s301 = sshll.u32 %s293, 4
          %s302 = int_to_ptr.vmem [resolvable:$true] %s301
          %307 = dma.hbm_to_vmem [thread:$0]  %s300, 256, %s302, %s290, 128, 128, 8
        $region48: #{cgen_ga_diffusion_step.1} parent=43 // pred_fallthru
          _
        // Predicated region
        $region49: #{cgen_ga_diffusion_step.1} parent=43 // pred_check
          %p308 = pneg %p109
        $region50: #{cgen_ga_diffusion_step.1} parent=43 // pred_check_branch
          %310 = sbr.rel (%p308) target = $region52
        $region51: #{cgen_ga_diffusion_step.1} parent=43 // pred_region
          %p311 = scmp.lt.s32.totalorder %s21, 7
          %s312 = scalar_select %p311, %s21, 7
          %s313 = scalar_lea.vmem %s3, %s312
        $region52: #{cgen_ga_diffusion_step.1} parent=43 // pred_fallthru
          _
      $region44: #{cgen_ga_diffusion_step.1} parent=5 // pred_fallthru
        _
      %p314 = scmp.le.s32.totalorder 1, %s21
      %p315 = scmp.lt.s32.totalorder %s21, 9
      %p316 = pnand %p314, %p315
      %p317 = pneg %p316
      // Predicated region
      $region53: #{cgen_ga_diffusion_step.1} parent=5 // pred_check
        _
      $region54: #{cgen_ga_diffusion_step.1} parent=5 // pred_check_branch
        %319 = sbr.rel (%p316) target = $region56
      $region55: #{cgen_ga_diffusion_step.1} parent=5 // pred_region
        %s320 = ssub.s32 %s21, 1
        %s321 = sand.u32 %s76, 1
        %s322 = scalar_lea.sflag [#allocation3], %s321
        %s323 = sand.u32 %s76, 1
        %s324 = smul.addr %s323, 16
        %s325 = scalar_lea.vmem [#allocation2], %s324
        // Predicated region
        $region57: #{cgen_ga_diffusion_step.1} parent=55 // pred_check
          %p326 = pneg %p89
        $region58: #{cgen_ga_diffusion_step.1} parent=55 // pred_check_branch
          %328 = sbr.rel (%p326) target = $region60
        $region59: #{cgen_ga_diffusion_step.1} parent=55 // pred_region
          %330 = dma.done %s322, 256
        $region60: #{cgen_ga_diffusion_step.1} parent=55 // pred_fallthru
          _
        %p331 = pneg %p42
        %p332 = pneg %p39
        %p333 = pneg %p63
        %p334 = pneg %p60
        %s335 = sand.u32 %s76, 1
        %s336 = scalar_lea.sflag [#allocation3], %s335
        %s337 = sand.u32 %s76, 1
        %s338 = smul.addr %s337, 16
        %s339 = scalar_lea.vmem [#allocation2], %s338
        %p340 = pneg %p89
        %p341 = pneg %p86
        %p342 = scmp.lt.s32.totalorder %s26, 7
        %s343 = scalar_select %p342, %s26, 7
        %s344 = scalar_lea.vmem %s3, %s343
        %p345 = pneg %p115
        %p346 = pneg %p112
        %p347 = pneg %p136
        %p348 = pneg %p133
        %p349 = pneg %p157
        %p350 = pneg %p154
        %p351 = pneg %p178
        %p352 = pneg %p175
        %p353 = pneg %p199
        %p354 = pneg %p196
        %p355 = pneg %p220
        %p356 = pneg %p217
        %p357 = pneg %p246
        %p358 = pneg %p243
        %s359 = sand.u32 %s233, 1
        %s360 = scalar_lea.sflag [#allocation4], %s359
        %s361 = sand.u32 %s233, 1
        %s362 = smul.addr %s361, 16
        %s363 = scalar_lea.vmem [#allocation5], %s362
        %p364 = scmp.lt.s32.totalorder %s26, 7
        %s365 = scalar_select %p364, %s26, 7
        %s366 = scalar_lea.vmem %s3, %s365
        %v367 = vld [vmem:[%s0] sm:$0xff]
        %v368 = vld [vmem:[%s0 + $0x8] sm:$0xff]
        %v369 = vld [vmem:[%s325] sm:$0xff]
        %v370 = vld [vmem:[%s325 + $0x8] sm:$0xff]
        %v371 = vld [vmem:[%s366] sm:$0x1]
        %v373 = vperm.slane %v371, 0
        %v375 = vadd.f32 %v369, %v373
        %v376 = vadd.f32 %v370, %v373
        %v377 = vld [vmem:[%s1] sm:$0xff]
        %v378 = vld [vmem:[%s1 + $0x8] sm:$0xff]
        %v379 = vadd.f32 %v375, %v377
        %v380 = vadd.f32 %v376, %v378
        %v381 = vld [vmem:[%s8] sm:$0x1]
        %v382 = vld [vmem:[%s8 + $0x1] sm:$0x1]
        %v383 = vld [vmem:[%s8 + $0x2] sm:$0x1]
        %v384 = vld [vmem:[%s8 + $0x3] sm:$0x1]
        %v385 = vld [vmem:[%s4] sm:$0xff]
        %v386 = vld [vmem:[%s4 + $0x8] sm:$0xff]
        %v387 = vld [vmem:[%s4 + $0x10] sm:$0xff]
        %v388 = vld [vmem:[%s4 + $0x18] sm:$0xff]
        %vm389 = vcmask 261120
        %v391 = vsel %vm389, %v379, 0
        %v394 = vsel %vm389, %v380, 0
        %396 = vmatpush.msra.mxu0 0.0
        %397 = vmatpush.msra.mxu0 0.0
        %398 = vmatpush.msra.mxu0 0.0
        %399 = vmatpush.msra.mxu0 0.0
        %400 = vmatpush.msra.mxu0 0.0
        %401 = vmatpush.msra.mxu0 0.0
        %402 = vmatpush.msra.mxu0 0.0
        %403 = vmatpush.msra.mxu0 0.0
        %404 = vmatpush.msra.mxu0 0.0
        %405 = vmatpush.msra.mxu0 0.0
        %406 = vmatpush.msra.mxu0 0.0
        %407 = vmatpush.msra.mxu0 0.0
        %408 = vmatpush.msra.mxu0 %v388
        %409 = vmatpush.msra.mxu0 %v387
        %410 = vmatpush.msra.mxu0 %v386
        %411 = vmatpush.msra.mxu0 %v385
        %412 = vmatmul.f32.gmra.mxu0 %v391
        %v413 = vpop.f32.mrf.mxu0
        %v414 = vadd.f32 0.0, %v413
        %415 = vmatmul.f32.gmra.mxu0 %v394
        %v416 = vpop.f32.mrf.mxu0
        %v417 = vadd.f32 0.0, %v416
        %418 = vdwg.mxu0
        %v419 = vperm.slane %v381, 0
        %vm420 = vcmask 130048
        %v422 = vsel %vm420, %v367, 0
        %v425 = vsel %vm420, %v368, 0
        %427 = vmatpush.msra.mxu0 0.0
        %428 = vmatpush.msra.mxu0 0.0
        %429 = vmatpush.msra.mxu0 0.0
        %430 = vmatpush.msra.mxu0 0.0
        %431 = vmatpush.msra.mxu0 0.0
        %432 = vmatpush.msra.mxu0 0.0
        %433 = vmatpush.msra.mxu0 0.0
        %434 = vmatpush.msra.mxu0 0.0
        %435 = vmatpush.msra.mxu0 0.0
        %436 = vmatpush.msra.mxu0 0.0
        %437 = vmatpush.msra.mxu0 0.0
        %438 = vmatpush.msra.mxu0 0.0
        %439 = vmatpush.msra.mxu0 0.0
        %440 = vmatpush.msra.mxu0 0.0
        %441 = vmatpush.msra.mxu0 %v417
        %442 = vmatpush.msra.mxu0 %v414
        %443 = vmatmul.f32.gmra.mxu0 %v422
        %v444 = vpop.f32.mrf.mxu0
        %v445 = vadd.f32 %v419, %v444
        %446 = vmatmul.f32.gmra.mxu0 %v425
        %v447 = vpop.f32.mrf.mxu0
        %v448 = vadd.f32 %v419, %v447
        %449 = vdwg.mxu0
        %v450 = vxor.u32 %v445, 2147483648
        %v451 = vxor.u32 %v448, 2147483648
        %v452 = vmul.f32 %v450, 1.442695
        %v453 = vpow.pop %v452
        %v454 = vmul.f32 %v451, 1.442695
        %v455 = vpow.pop %v454
        %v456 = vadd.f32 %v453, 1.0
        %v457 = vadd.f32 %v455, 1.0
        %v458 = vrcp.pop %v456
        %v459 = vmul.f32 %v456, %v458
        %v460 = vsub.f32 1.0, %v459
        %v461 = vmul.f32 %v458, %v460
        %v462 = vadd.f32 %v458, %v461
        %vm463 = vweird.f32 %v456
        %vm464 = vweird.f32 %v458
        %vm465 = vmor %vm463, %vm464
        %v466 = vsel %vm465, %v458, %v462
        %v467 = vand.u32 2147483647, %v456
        %vm468 = vcmp.eq.f32.partialorder %v467, 8.507059e+37
        %v469 = vand.u32 %v456, 2147483648
        %v470 = vor.u32 1.1754944e-38, %v469
        %v471 = vsel %vm468, %v470, %v466
        %v472 = vmul.f32 1.0, %v471
        %v473 = vrcp.pop %v457
        %v474 = vmul.f32 %v457, %v473
        %v475 = vsub.f32 1.0, %v474
        %v476 = vmul.f32 %v473, %v475
        %v477 = vadd.f32 %v473, %v476
        %vm478 = vweird.f32 %v457
        %vm479 = vweird.f32 %v473
        %vm480 = vmor %vm478, %vm479
        %v481 = vsel %vm480, %v473, %v477
        %v482 = vand.u32 2147483647, %v457
        %vm483 = vcmp.eq.f32.partialorder %v482, 8.507059e+37
        %v484 = vand.u32 %v457, 2147483648
        %v485 = vor.u32 1.1754944e-38, %v484
        %v486 = vsel %vm483, %v485, %v481
        %v487 = vmul.f32 1.0, %v486
        %v488 = vmul.f32 %v445, %v472
        %v489 = vmul.f32 %v448, %v487
        %v490 = vld [vmem:[%s5] sm:$0xff]
        %v491 = vld [vmem:[%s5 + $0x8] sm:$0xff]
        %v492 = vld [vmem:[%s5 + $0x10] sm:$0xff]
        %v493 = vld [vmem:[%s5 + $0x18] sm:$0xff]
        %v495 = vsel %vm389, %v488, 0
        %v498 = vsel %vm389, %v489, 0
        %500 = vmatpush.msra.mxu0 0.0
        %501 = vmatpush.msra.mxu0 0.0
        %502 = vmatpush.msra.mxu0 0.0
        %503 = vmatpush.msra.mxu0 0.0
        %504 = vmatpush.msra.mxu0 0.0
        %505 = vmatpush.msra.mxu0 0.0
        %506 = vmatpush.msra.mxu0 0.0
        %507 = vmatpush.msra.mxu0 0.0
        %508 = vmatpush.msra.mxu0 0.0
        %509 = vmatpush.msra.mxu0 0.0
        %510 = vmatpush.msra.mxu0 0.0
        %511 = vmatpush.msra.mxu0 0.0
        %512 = vmatpush.msra.mxu0 %v493
        %513 = vmatpush.msra.mxu0 %v492
        %514 = vmatpush.msra.mxu0 %v491
        %515 = vmatpush.msra.mxu0 %v490
        %516 = vmatmul.f32.gmra.mxu0 %v495
        %v517 = vpop.f32.mrf.mxu0
        %v518 = vadd.f32 0.0, %v517
        %519 = vmatmul.f32.gmra.mxu0 %v498
        %v520 = vpop.f32.mrf.mxu0
        %v521 = vadd.f32 0.0, %v520
        %522 = vdwg.mxu0
        %v523 = vperm.slane %v382, 0
        %524 = vmatpush.msra.mxu0 0.0
        %525 = vmatpush.msra.mxu0 0.0
        %526 = vmatpush.msra.mxu0 0.0
        %527 = vmatpush.msra.mxu0 0.0
        %528 = vmatpush.msra.mxu0 0.0
        %529 = vmatpush.msra.mxu0 0.0
        %530 = vmatpush.msra.mxu0 0.0
        %531 = vmatpush.msra.mxu0 0.0
        %532 = vmatpush.msra.mxu0 0.0
        %533 = vmatpush.msra.mxu0 0.0
        %534 = vmatpush.msra.mxu0 0.0
        %535 = vmatpush.msra.mxu0 0.0
        %536 = vmatpush.msra.mxu0 0.0
        %537 = vmatpush.msra.mxu0 0.0
        %538 = vmatpush.msra.mxu0 %v521
        %539 = vmatpush.msra.mxu0 %v518
        %540 = vmatmul.f32.gmra.mxu0 %v422
        %v541 = vpop.f32.mrf.mxu0
        %v542 = vadd.f32 %v523, %v541
        %543 = vmatmul.f32.gmra.mxu0 %v425
        %v544 = vpop.f32.mrf.mxu0
        %v545 = vadd.f32 %v523, %v544
        %546 = vdwg.mxu0
        %v547 = vxor.u32 %v542, 2147483648
        %v548 = vxor.u32 %v545, 2147483648
        %v549 = vmul.f32 %v547, 1.442695
        %v550 = vpow.pop %v549
        %v551 = vmul.f32 %v548, 1.442695
        %v552 = vpow.pop %v551
        %v553 = vadd.f32 %v550, 1.0
        %v554 = vadd.f32 %v552, 1.0
        %v555 = vrcp.pop %v553
        %v556 = vmul.f32 %v553, %v555
        %v557 = vsub.f32 1.0, %v556
        %v558 = vmul.f32 %v555, %v557
        %v559 = vadd.f32 %v555, %v558
        %vm560 = vweird.f32 %v553
        %vm561 = vweird.f32 %v555
        %vm562 = vmor %vm560, %vm561
        %v563 = vsel %vm562, %v555, %v559
        %v564 = vand.u32 2147483647, %v553
        %vm565 = vcmp.eq.f32.partialorder %v564, 8.507059e+37
        %v566 = vand.u32 %v553, 2147483648
        %v567 = vor.u32 1.1754944e-38, %v566
        %v568 = vsel %vm565, %v567, %v563
        %v569 = vmul.f32 1.0, %v568
        %v570 = vrcp.pop %v554
        %v571 = vmul.f32 %v554, %v570
        %v572 = vsub.f32 1.0, %v571
        %v573 = vmul.f32 %v570, %v572
        %v574 = vadd.f32 %v570, %v573
        %vm575 = vweird.f32 %v554
        %vm576 = vweird.f32 %v570
        %vm577 = vmor %vm575, %vm576
        %v578 = vsel %vm577, %v570, %v574
        %v579 = vand.u32 2147483647, %v554
        %vm580 = vcmp.eq.f32.partialorder %v579, 8.507059e+37
        %v581 = vand.u32 %v554, 2147483648
        %v582 = vor.u32 1.1754944e-38, %v581
        %v583 = vsel %vm580, %v582, %v578
        %v584 = vmul.f32 1.0, %v583
        %v585 = vmul.f32 %v542, %v569
        %v586 = vmul.f32 %v545, %v584
        %v587 = vld [vmem:[%s6] sm:$0xff]
        %v588 = vld [vmem:[%s6 + $0x8] sm:$0xff]
        %589 = vmatpush.msra.mxu0 0.0
        %590 = vmatpush.msra.mxu0 0.0
        %591 = vmatpush.msra.mxu0 0.0
        %592 = vmatpush.msra.mxu0 0.0
        %593 = vmatpush.msra.mxu0 0.0
        %594 = vmatpush.msra.mxu0 0.0
        %595 = vmatpush.msra.mxu0 0.0
        %596 = vmatpush.msra.mxu0 0.0
        %597 = vmatpush.msra.mxu0 0.0
        %598 = vmatpush.msra.mxu0 0.0
        %599 = vmatpush.msra.mxu0 0.0
        %600 = vmatpush.msra.mxu0 0.0
        %601 = vmatpush.msra.mxu0 0.0
        %602 = vmatpush.msra.mxu0 0.0
        %603 = vmatpush.msra.mxu0 %v586
        %604 = vmatpush.msra.mxu0 %v585
        %605 = vmatmul.f32.gmra.mxu0 %v422
        %v606 = vpop.f32.mrf.mxu0
        %v607 = vadd.f32 0.0, %v606
        %608 = vmatmul.f32.gmra.mxu0 %v425
        %v609 = vpop.f32.mrf.mxu0
        %v610 = vadd.f32 0.0, %v609
        %611 = vdwg.mxu0
        %v612 = vperm.slane %v383, 0
        %v614 = vsel %vm420, %v607, 0
        %v617 = vsel %vm420, %v610, 0
        %619 = vmatpush.msra.mxu0 0.0
        %620 = vmatpush.msra.mxu0 0.0
        %621 = vmatpush.msra.mxu0 0.0
        %622 = vmatpush.msra.mxu0 0.0
        %623 = vmatpush.msra.mxu0 0.0
        %624 = vmatpush.msra.mxu0 0.0
        %625 = vmatpush.msra.mxu0 0.0
        %626 = vmatpush.msra.mxu0 0.0
        %627 = vmatpush.msra.mxu0 0.0
        %628 = vmatpush.msra.mxu0 0.0
        %629 = vmatpush.msra.mxu0 0.0
        %630 = vmatpush.msra.mxu0 0.0
        %631 = vmatpush.msra.mxu0 0.0
        %632 = vmatpush.msra.mxu0 0.0
        %633 = vmatpush.msra.mxu0 %v588
        %634 = vmatpush.msra.mxu0 %v587
        %635 = vmatmul.f32.gmra.mxu0 %v614
        %v636 = vpop.f32.mrf.mxu0
        %v637 = vadd.f32 %v612, %v636
        %638 = vmatmul.f32.gmra.mxu0 %v617
        %v639 = vpop.f32.mrf.mxu0
        %v640 = vadd.f32 %v612, %v639
        %641 = vdwg.mxu0
        %v642 = vxor.u32 %v637, 2147483648
        %v643 = vxor.u32 %v640, 2147483648
        %v644 = vmul.f32 %v642, 1.442695
        %v645 = vpow.pop %v644
        %v646 = vmul.f32 %v643, 1.442695
        %v647 = vpow.pop %v646
        %v648 = vadd.f32 %v645, 1.0
        %v649 = vadd.f32 %v647, 1.0
        %v650 = vrcp.pop %v648
        %v651 = vmul.f32 %v648, %v650
        %v652 = vsub.f32 1.0, %v651
        %v653 = vmul.f32 %v650, %v652
        %v654 = vadd.f32 %v650, %v653
        %vm655 = vweird.f32 %v648
        %vm656 = vweird.f32 %v650
        %vm657 = vmor %vm655, %vm656
        %v658 = vsel %vm657, %v650, %v654
        %v659 = vand.u32 2147483647, %v648
        %vm660 = vcmp.eq.f32.partialorder %v659, 8.507059e+37
        %v661 = vand.u32 %v648, 2147483648
        %v662 = vor.u32 1.1754944e-38, %v661
        %v663 = vsel %vm660, %v662, %v658
        %v664 = vmul.f32 1.0, %v663
        %v665 = vrcp.pop %v649
        %v666 = vmul.f32 %v649, %v665
        %v667 = vsub.f32 1.0, %v666
        %v668 = vmul.f32 %v665, %v667
        %v669 = vadd.f32 %v665, %v668
        %vm670 = vweird.f32 %v649
        %vm671 = vweird.f32 %v665
        %vm672 = vmor %vm670, %vm671
        %v673 = vsel %vm672, %v665, %v669
        %v674 = vand.u32 2147483647, %v649
        %vm675 = vcmp.eq.f32.partialorder %v674, 8.507059e+37
        %v676 = vand.u32 %v649, 2147483648
        %v677 = vor.u32 1.1754944e-38, %v676
        %v678 = vsel %vm675, %v677, %v673
        %v679 = vmul.f32 1.0, %v678
        %v680 = vmul.f32 %v637, %v664
        %v681 = vmul.f32 %v640, %v679
        %v682 = vld [vmem:[%s7] sm:$0xff]
        %v683 = vld [vmem:[%s7 + $0x8] sm:$0xff]
        %v684 = vld [vmem:[%s7 + $0x10] sm:$0xff]
        %v685 = vld [vmem:[%s7 + $0x18] sm:$0xff]
        %v686 = vld [vmem:[%s7 + $0x20] sm:$0xff]
        %v687 = vld [vmem:[%s7 + $0x28] sm:$0xff]
        %v688 = vld [vmem:[%s7 + $0x30] sm:$0xff]
        %v689 = vld [vmem:[%s7 + $0x38] sm:$0xff]
        %690 = vmatpush.msra.mxu0 0.0
        %691 = vmatpush.msra.mxu0 0.0
        %692 = vmatpush.msra.mxu0 0.0
        %693 = vmatpush.msra.mxu0 0.0
        %694 = vmatpush.msra.mxu0 0.0
        %695 = vmatpush.msra.mxu0 0.0
        %696 = vmatpush.msra.mxu0 0.0
        %697 = vmatpush.msra.mxu0 0.0
        %698 = vmatpush.msra.mxu0 0.0
        %699 = vmatpush.msra.mxu0 0.0
        %700 = vmatpush.msra.mxu0 0.0
        %701 = vmatpush.msra.mxu0 0.0
        %702 = vmatpush.msra.mxu0 %v689
        %703 = vmatpush.msra.mxu0 %v688
        %704 = vmatpush.msra.mxu0 %v687
        %705 = vmatpush.msra.mxu0 %v686
        %706 = vmatmul.f32.gmra.mxu0 %v495
        %v707 = vpop.f32.mrf.mxu0
        %v708 = vadd.f32 0.0, %v707
        %709 = vmatmul.f32.gmra.mxu0 %v498
        %v710 = vpop.f32.mrf.mxu0
        %v711 = vadd.f32 0.0, %v710
        %712 = vdwg.mxu0
        %v714 = vsel %vm389, %v680, 0
        %v717 = vsel %vm389, %v681, 0
        %719 = vmatpush.msra.mxu0 0.0
        %720 = vmatpush.msra.mxu0 0.0
        %721 = vmatpush.msra.mxu0 0.0
        %722 = vmatpush.msra.mxu0 0.0
        %723 = vmatpush.msra.mxu0 0.0
        %724 = vmatpush.msra.mxu0 0.0
        %725 = vmatpush.msra.mxu0 0.0
        %726 = vmatpush.msra.mxu0 0.0
        %727 = vmatpush.msra.mxu0 0.0
        %728 = vmatpush.msra.mxu0 0.0
        %729 = vmatpush.msra.mxu0 0.0
        %730 = vmatpush.msra.mxu0 0.0
        %731 = vmatpush.msra.mxu0 %v685
        %732 = vmatpush.msra.mxu0 %v684
        %733 = vmatpush.msra.mxu0 %v683
        %734 = vmatpush.msra.mxu0 %v682
        %735 = vmatmul.f32.gmra.mxu0 %v714
        %v736 = vpop.f32.mrf.mxu0
        %v737 = vadd.f32 %v708, %v736
        %738 = vmatmul.f32.gmra.mxu0 %v717
        %v739 = vpop.f32.mrf.mxu0
        %v740 = vadd.f32 %v711, %v739
        %741 = vdwg.mxu0
        %v742 = vperm.slane %v384, 0
        %743 = vmatpush.msra.mxu0 0.0
        %744 = vmatpush.msra.mxu0 0.0
        %745 = vmatpush.msra.mxu0 0.0
        %746 = vmatpush.msra.mxu0 0.0
        %747 = vmatpush.msra.mxu0 0.0
        %748 = vmatpush.msra.mxu0 0.0
        %749 = vmatpush.msra.mxu0 0.0
        %750 = vmatpush.msra.mxu0 0.0
        %751 = vmatpush.msra.mxu0 0.0
        %752 = vmatpush.msra.mxu0 0.0
        %753 = vmatpush.msra.mxu0 0.0
        %754 = vmatpush.msra.mxu0 0.0
        %755 = vmatpush.msra.mxu0 0.0
        %756 = vmatpush.msra.mxu0 0.0
        %757 = vmatpush.msra.mxu0 %v740
        %758 = vmatpush.msra.mxu0 %v737
        %759 = vmatmul.f32.gmra.mxu0 %v422
        %v760 = vpop.f32.mrf.mxu0
        %v761 = vadd.f32 %v742, %v760
        %762 = vmatmul.f32.gmra.mxu0 %v425
        %v763 = vpop.f32.mrf.mxu0
        %v764 = vadd.f32 %v742, %v763
        %765 = vdwg.mxu0
        %v766 = vxor.u32 %v761, 2147483648
        %v767 = vxor.u32 %v764, 2147483648
        %v768 = vmul.f32 %v766, 1.442695
        %v769 = vpow.pop %v768
        %v770 = vmul.f32 %v767, 1.442695
        %v771 = vpow.pop %v770
        %v772 = vadd.f32 %v769, 1.0
        %v773 = vadd.f32 %v771, 1.0
        %v774 = vrcp.pop %v772
        %v775 = vmul.f32 %v772, %v774
        %v776 = vsub.f32 1.0, %v775
        %v777 = vmul.f32 %v774, %v776
        %v778 = vadd.f32 %v774, %v777
        %vm779 = vweird.f32 %v772
        %vm780 = vweird.f32 %v774
        %vm781 = vmor %vm779, %vm780
        %v782 = vsel %vm781, %v774, %v778
        %v783 = vand.u32 2147483647, %v772
        %vm784 = vcmp.eq.f32.partialorder %v783, 8.507059e+37
        %v785 = vand.u32 %v772, 2147483648
        %v786 = vor.u32 1.1754944e-38, %v785
        %v787 = vsel %vm784, %v786, %v782
        %v788 = vmul.f32 1.0, %v787
        %v789 = vrcp.pop %v773
        %v790 = vmul.f32 %v773, %v789
        %v791 = vsub.f32 1.0, %v790
        %v792 = vmul.f32 %v789, %v791
        %v793 = vadd.f32 %v789, %v792
        %vm794 = vweird.f32 %v773
        %vm795 = vweird.f32 %v789
        %vm796 = vmor %vm794, %vm795
        %v797 = vsel %vm796, %v789, %v793
        %v798 = vand.u32 2147483647, %v773
        %vm799 = vcmp.eq.f32.partialorder %v798, 8.507059e+37
        %v800 = vand.u32 %v773, 2147483648
        %v801 = vor.u32 1.1754944e-38, %v800
        %v802 = vsel %vm799, %v801, %v797
        %v803 = vmul.f32 1.0, %v802
        %v804 = vmul.f32 %v761, %v788
        %v805 = vmul.f32 %v764, %v803
        %806 = vst.msk [vmem:[%s363] sm:$0xff] %vm389, %v804
        %807 = vst.msk [vmem:[%s363 + $0x8] sm:$0xff] %vm389, %v805
        %s808 = sand.u32 %s233, 1
        %s809 = scalar_lea.sflag [#allocation4], %s808
        %s810 = sand.u32 %s233, 1
        %s811 = smul.addr %s810, 16
        %s812 = scalar_lea.vmem [#allocation5], %s811
        // Predicated region
        $region61: #{cgen_ga_diffusion_step.1} parent=55 // pred_check
          %p813 = pneg %p243
        $region62: #{cgen_ga_diffusion_step.1} parent=55 // pred_check_branch
          %815 = sbr.rel (%p813) target = $region64
        $region63: #{cgen_ga_diffusion_step.1} parent=55 // pred_region
          %817 = vsyncadd %s809, 0
          %s818 = smul.addr %s26, 2
          %s819 = smul.addr %s818, 8
          %s820 = scalar_lea.hbm %s9, %s819
          %s821 = sshll.u32 %s812, 4
          %s822 = int_to_ptr.vmem [resolvable:$true] %s821
          %s823 = sshll.u32 %s820, 4
          %s824 = int_to_ptr.hbm [resolvable:$true] %s823
          %829 = dma.vmem_to_hbm [thread:$0]  %s822, 256, %s824, %s809, 128, 128, 8
        $region64: #{cgen_ga_diffusion_step.1} parent=55 // pred_fallthru
          _
      $region56: #{cgen_ga_diffusion_step.1} parent=5 // pred_fallthru
        _
      %p830 = scmp.le.s32.totalorder 2, %s21
      // Predicated region
      $region65: #{cgen_ga_diffusion_step.1} parent=5 // pred_check
        %p831 = pneg %p830
      $region66: #{cgen_ga_diffusion_step.1} parent=5 // pred_check_branch
        %833 = sbr.rel (%p831) target = $region68
      $region67: #{cgen_ga_diffusion_step.1} parent=5 // pred_region
        %s834 = ssub.s32 %s21, 2
        // Predicated region
        $region69: #{cgen_ga_diffusion_step.1} parent=67 // pred_check
          %p835 = pneg %p249
        $region70: #{cgen_ga_diffusion_step.1} parent=67 // pred_check_branch
          %837 = sbr.rel (%p835) target = $region72
        $region71: #{cgen_ga_diffusion_step.1} parent=67 // pred_region
          %s838 = sand.u32 %s234, 1
          %s839 = scalar_lea.sflag [#allocation4], %s838
          %s840 = sand.u32 %s234, 1
          %s841 = smul.addr %s840, 16
          %s842 = scalar_lea.vmem [#allocation5], %s841
          %844 = dma.done %s839, 256
        $region72: #{cgen_ga_diffusion_step.1} parent=67 // pred_fallthru
          _
      $region68: #{cgen_ga_diffusion_step.1} parent=5 // pred_fallthru
        _
    $region6: #{cgen_ga_diffusion_step.1} parent=1 // loop_footer
      %s25 = sadd.s32 1, %s21
    $region7: #{cgen_ga_diffusion_step.1} parent=1 // loop_footer_branch
      %20 = sbr.rel target = $region3
    $region8: #{cgen_ga_diffusion_step.1} parent=1 // loop_exit
      _
    %845 = vsyncpa [#allocation3], 1
    %s846 = scalar_lea.sflag [#allocation3], 1
    %847 = vsyncpa %s846, 1
    %848 = vsyncpa [#allocation4], 1
    %s849 = scalar_lea.sflag [#allocation4], 1
    %850 = vsyncpa %s849, 1

</llo_original>
